<compile_context>
chip_gen: v7x
topology: tpu7x:2x2x1
jax: 0.10.0
libtpu: 0.0.40
codegen_flags: <defaults>
</compile_context>

<pallas_src>
import math
import functools

import jax
import jax.numpy as jnp
from jax.experimental import pallas as pl
from jax.experimental.pallas import tpu as pltpu


def _round_up(x, m):
    return ((x + m - 1) // m) * m


def _pick_tile(dim, target, align):
    """Tile for a dim that may be zero-padded: returns (tile, padded_dim).
    Prefers the full dim (small) or an aligned exact divisor (no padding)."""
    if dim <= target:
        return dim, dim
    t = (target // align) * align
    while t >= align:
        if dim % t == 0:
            return t, dim
        t -= align
    return target, _round_up(dim, target)


def _pick_divisor_tile(dim, target, align):
    """Tile that exactly divides dim (no padding allowed); falls back to dim."""
    if dim <= target:
        return dim
    t = (target // align) * align
    while t >= align:
        if dim % t == 0:
            return t
        t -= align
    return dim


# ----------------------------------------------------------------------------
# Tiled linear (+ optional fused GELU): bf16 MXU operands, f32 accumulation,
# bf16 output.
# ----------------------------------------------------------------------------
def _linear_kernel(x_ref, w_ref, b_ref, o_ref, acc_ref, *, gelu):
    @pl.when(pl.program_id(2) == 0)
    def _():
        acc_ref[...] = jnp.zeros_like(acc_ref)

    acc_ref[...] += jnp.dot(x_ref[...], w_ref[...],
                            preferred_element_type=jnp.float32)

    @pl.when(pl.program_id(2) == pl.num_programs(2) - 1)
    def _():
        y = acc_ref[...] + b_ref[...]
        if gelu:
            # TODO(synk): BERT uses exact erf-based GELU; tanh approximation here.
            y = 0.5 * y * (1.0 + jnp.tanh(
                0.7978845608028654 * (y + 0.044715 * y * y * y)))
        o_ref[...] = y.astype(o_ref.dtype)


def pallas_linear(x, w, b, gelu=False):
    """x: [M, K] -> bf16 in-kernel, w: [K, N] bf16, b: [N] f32 -> [M, N] bf16."""
    x = x.astype(jnp.bfloat16)
    m, k = x.shape
    _, n = w.shape
    tm, mp = _pick_tile(m, 512, 8)
    tk, kp = _pick_tile(k, 512, 128)
    tn, np_ = _pick_tile(n, 512, 128)
    if mp != m or kp != k:
        x = jnp.pad(x, ((0, mp - m), (0, kp - k)))
    if kp != k or np_ != n:
        w = jnp.pad(w, ((0, kp - k), (0, np_ - n)))
    if np_ != n:
        b = jnp.pad(b, (0, np_ - n))

    out = pl.pallas_call(
        functools.partial(_linear_kernel, gelu=gelu),
        out_shape=jax.ShapeDtypeStruct((mp, np_), jnp.bfloat16),
        grid_spec=pltpu.PrefetchScalarGridSpec(
            num_scalar_prefetch=0,
            grid=(mp // tm, np_ // tn, kp // tk),
            in_specs=[
                pl.BlockSpec((tm, tk), lambda i, j, kk: (i, kk)),
                pl.BlockSpec((tk, tn), lambda i, j, kk: (kk, j)),
                pl.BlockSpec((1, tn), lambda i, j, kk: (0, j)),
            ],
            out_specs=pl.BlockSpec((tm, tn), lambda i, j, kk: (i, j)),
            scratch_shapes=[pltpu.VMEM((tm, tn), jnp.float32)],
        ),
        compiler_params=pltpu.CompilerParams(
            dimension_semantics=("parallel", "parallel", "arbitrary"),
            vmem_limit_bytes=32 * 1024 * 1024),
    )(x, w, b.reshape(1, np_))
    if mp != m or np_ != n:
        out = out[:m, :n]
    return out


# ----------------------------------------------------------------------------
# Fused linear + bias + residual + LayerNorm (BERT eps=1e-12).
# Output tile spans the full hidden dim so the row-wise LN is done in the
# K-finalize epilogue while the f32 accumulator is still resident in VMEM.
# ----------------------------------------------------------------------------
def _linear_res_ln_kernel(x_ref, w_ref, b_ref, r_ref, g_ref, be_ref, o_ref,
                          acc_ref):
    @pl.when(pl.program_id(1) == 0)
    def _():
        acc_ref[...] = jnp.zeros_like(acc_ref)

    acc_ref[...] += jnp.dot(x_ref[...], w_ref[...],
                            preferred_element_type=jnp.float32)

    @pl.when(pl.program_id(1) == pl.num_programs(1) - 1)
    def _():
        y = acc_ref[...] + b_ref[...] + r_ref[...].astype(jnp.float32)
        mean = jnp.mean(y, axis=-1, keepdims=True)
        var = jnp.mean((y - mean) ** 2, axis=-1, keepdims=True)
        inv = jax.lax.rsqrt(var + 1e-12)
        o_ref[...] = ((y - mean) * inv * g_ref[...] + be_ref[...]
                      ).astype(o_ref.dtype)


def pallas_linear_residual_layernorm(x, w, b, residual, gamma, beta):
    """LayerNorm(residual + x @ w + b) -> bf16 [M, H]."""
    x = x.astype(jnp.bfloat16)
    residual = residual.astype(jnp.bfloat16)
    m, k = x.shape
    _, n = w.shape
    tm, mp = _pick_tile(m, 512, 8)
    tk, kp = _pick_tile(k, 512, 128)
    if mp != m or kp != k:
        x = jnp.pad(x, ((0, mp - m), (0, kp - k)))
    if kp != k:
        w = jnp.pad(w, ((0, kp - k), (0, 0)))
    if mp != m:
        residual = jnp.pad(residual, ((0, mp - m), (0, 0)))

    out = pl.pallas_call(
        _linear_res_ln_kernel,
        out_shape=jax.ShapeDtypeStruct((mp, n), jnp.bfloat16),
        grid_spec=pltpu.PrefetchScalarGridSpec(
            num_scalar_prefetch=0,
            grid=(mp // tm, kp // tk),
            in_specs=[
                pl.BlockSpec((tm, tk), lambda i, kk: (i, kk)),
                pl.BlockSpec((tk, n), lambda i, kk: (kk, 0)),
                pl.BlockSpec((1, n), lambda i, kk: (0, 0)),
                pl.BlockSpec((tm, n), lambda i, kk: (i, 0)),
                pl.BlockSpec((1, n), lambda i, kk: (0, 0)),
                pl.BlockSpec((1, n), lambda i, kk: (0, 0)),
            ],
            out_specs=pl.BlockSpec((tm, n), lambda i, kk: (i, 0)),
            scratch_shapes=[pltpu.VMEM((tm, n), jnp.float32)],
        ),
        compiler_params=pltpu.CompilerParams(
            dimension_semantics=("parallel", "arbitrary"),
            vmem_limit_bytes=32 * 1024 * 1024),
    )(x, w, b.reshape(1, n), residual, gamma.reshape(1, n), beta.reshape(1, n))
    return out[:m] if mp != m else out


# ----------------------------------------------------------------------------
# Standalone LayerNorm (embeddings only); f32 in, bf16 out.
# ----------------------------------------------------------------------------
def _layernorm_kernel(x_ref, g_ref, b_ref, o_ref):
    x = x_ref[...].astype(jnp.float32)
    mean = jnp.mean(x, axis=-1, keepdims=True)
    var = jnp.mean((x - mean) ** 2, axis=-1, keepdims=True)
    inv = jax.lax.rsqrt(var + 1e-12)
    o_ref[...] = ((x - mean) * inv * g_ref[...] + b_ref[...]).astype(o_ref.dtype)


def pallas_layernorm(x, gamma, beta):
    m, h = x.shape
    tm, mp = _pick_tile(m, 1024, 8)
    if mp != m:
        x = jnp.pad(x, ((0, mp - m), (0, 0)))
    out = pl.pallas_call(
        _layernorm_kernel,
        out_shape=jax.ShapeDtypeStruct((mp, h), jnp.bfloat16),
        grid=(mp // tm,),
        in_specs=[pl.BlockSpec((tm, h), lambda i: (i, 0)),
                  pl.BlockSpec((1, h), lambda i: (0, 0)),
                  pl.BlockSpec((1, h), lambda i: (0, 0))],
        out_specs=pl.BlockSpec((tm, h), lambda i: (i, 0)),
        compiler_params=pltpu.CompilerParams(dimension_semantics=("parallel",)),
    )(x, gamma.reshape(1, h), beta.reshape(1, h))
    return out[:m] if mp != m else out


# ----------------------------------------------------------------------------
# Attention: grid (batch, query-tile); Q/K/V sliced from the fused QKV tensor
# by BlockSpec index maps; per-head outputs concatenated in VMEM and written
# as one lane-dense [tq, H] slab.
# ----------------------------------------------------------------------------
def _attention_kernel(q_ref, k_ref, v_ref, bias_ref, o_ref, *, num_heads, scale):
    q = q_ref[0]            # [tq, H] bf16
    k = k_ref[0]            # [S,  H] bf16
    v = v_ref[0]            # [S,  H] bf16
    bias = bias_ref[0]      # [1,  S] f32 additive mask
    h = q.shape[-1]
    dh = h // num_heads

    head_outs = []
    for hh in range(num_heads):            # static unroll; num_heads is small
        lo = hh * dh
        qh = q[:, lo:lo + dh]
        kh = k[:, lo:lo + dh]
        vh = v[:, lo:lo + dh]
        # q @ k^T as an NT matmul (no explicit transpose), f32 accumulation.
        s = jax.lax.dot_general(qh, kh, (((1,), (1,)), ((), ())),
                                preferred_element_type=jnp.float32)
        s = s * scale + bias                                  # f32 scale + mask
        mmax = jnp.max(s, axis=-1, keepdims=True)
        p = jnp.exp(s - mmax)                                 # f32 softmax
        inv = pl.reciprocal(jnp.sum(p, axis=-1, keepdims=True), approx=True)
        p = (p * inv).astype(jnp.bfloat16)
        head_outs.append(jnp.dot(p, vh, preferred_element_type=jnp.float32))
    # Single lane-dense store (no per-head masked partial-lane stores).
    o_ref[0] = jnp.concatenate(head_outs, axis=-1).astype(o_ref.dtype)


def pallas_attention(qkv, bias, num_heads):
    """qkv: [B, S, 3H] bf16 (fused projection), bias: [B, 1, S] f32.
    Returns bf16 [B, S, H]."""
    b, s, three_h = qkv.shape
    h = three_h // 3
    dh = h // num_heads
    scale = 1.0 / math.sqrt(dh)
    tq = _pick_divisor_tile(s, 256, 8)
    # TODO(synk): for long sequences, stream K/V flash-style with an online
    # softmax accumulator instead of holding full [S, H] K/V blocks in VMEM.
    return pl.pallas_call(
        functools.partial(_attention_kernel, num_heads=num_heads, scale=scale),
        out_shape=jax.ShapeDtypeStruct((b, s, h), jnp.bfloat16),
        grid=(b, s // tq),
        in_specs=[
            pl.BlockSpec((1, tq, h), lambda i, qi: (i, qi, 0)),  # Q rows
            pl.BlockSpec((1, s, h), lambda i, qi: (i, 0, 1)),    # K (cols H:2H)
            pl.BlockSpec((1, s, h), lambda i, qi: (i, 0, 2)),    # V (cols 2H:3H)
            pl.BlockSpec((1, 1, s), lambda i, qi: (i, 0, 0)),
        ],
        out_specs=pl.BlockSpec((1, tq, h), lambda i, qi: (i, qi, 0)),
        compiler_params=pltpu.CompilerParams(
            dimension_semantics=("parallel", "parallel")),
    )(qkv, qkv, qkv, bias)


# ----------------------------------------------------------------------------
# average_pooling kernel (grid over batch): one-hot masks summed on the VPU,
# one bf16 x bf16 [T,S] x [S,H] matmul with f32 accumulation.
# Subword index 0 is padding, exactly like the torch reference.
# ----------------------------------------------------------------------------
def _avgpool_kernel(idx_ref, enc_ref, o_ref, *, num_subwords):
    idx = idx_ref[0]       # [T, Ns] int32
    enc = enc_ref[0]       # [S, H]  bf16
    t = idx.shape[0]
    s = enc.shape[0]
    s_iota = jax.lax.broadcasted_iota(jnp.int32, (t, s), 1)
    combined = jnp.zeros((t, s), jnp.float32)
    count = jnp.zeros((t, 1), jnp.float32)
    for kk in range(num_subwords):                      # static unroll (Ns small)
        idx_k = idx[:, kk:kk + 1]                       # [T, 1]
        valid_k = idx_k != 0                            # [T, 1]
        combined = combined + jnp.where((idx_k == s_iota) & valid_k, 1.0, 0.0)
        count = count + valid_k.astype(jnp.float32)
    summed = jnp.dot(combined.astype(jnp.bfloat16), enc,
                     preferred_element_type=jnp.float32)
    divisor = jnp.where(count == 0.0, 1.0, count)
    o_ref[0] = summed / divisor


def pallas_average_pooling(encoded, token_subword_index):
    b, s, h = encoded.shape
    _, t, ns = token_subword_index.shape
    return pl.pallas_call(
        functools.partial(_avgpool_kernel, num_subwords=ns),
        out_shape=jax.ShapeDtypeStruct((b, t, h), jnp.float32),
        grid=(b,),
        in_specs=[
            pl.BlockSpec((1, t, ns), lambda i: (i, 0, 0)),
            pl.BlockSpec((1, s, h), lambda i: (i, 0, 0)),
        ],
        out_specs=pl.BlockSpec((1, t, h), lambda i: (i, 0, 0)),
        compiler_params=pltpu.CompilerParams(dimension_semantics=("parallel",)),
    )(token_subword_index, encoded)


# ----------------------------------------------------------------------------
# Synthetic BERT parameters (deterministic init; no checkpoint loading).
# Matmul weights bf16 (MXU operands); LN params / biases / embeddings f32.
# QKV weights pre-fused into one [H, 3H] matrix per layer.
# ----------------------------------------------------------------------------
def init_bert_params(key, vocab_size, hidden, num_layers, intermediate,
                     max_pos, type_vocab):
    keys = jax.random.split(key, 4 + num_layers)
    std = 0.02
    params = {
        "word_emb": std * jax.random.normal(keys[0], (vocab_size, hidden), jnp.float32),
        "pos_emb": std * jax.random.normal(keys[1], (max_pos, hidden), jnp.float32),
        "type_emb": std * jax.random.normal(keys[2], (type_vocab, hidden), jnp.float32),
        "emb_ln_g": jnp.ones((hidden,), jnp.float32),
        "emb_ln_b": jnp.zeros((hidden,), jnp.float32),
        "layers": [],
    }
    for l in range(num_layers):
        lk = jax.random.split(keys[4 + l], 6)
        wq = std * jax.random.normal(lk[0], (hidden, hidden), jnp.float32)
        wk = std * jax.random.normal(lk[1], (hidden, hidden), jnp.float32)
        wv = std * jax.random.normal(lk[2], (hidden, hidden), jnp.float32)
        params["layers"].append({
            "wqkv": jnp.concatenate([wq, wk, wv], axis=1).astype(jnp.bfloat16),
            "bqkv": jnp.zeros((3 * hidden,), jnp.float32),
            "wo": (std * jax.random.normal(lk[3], (hidden, hidden), jnp.float32)
                   ).astype(jnp.bfloat16),
            "bo": jnp.zeros((hidden,), jnp.float32),
            "attn_ln_g": jnp.ones((hidden,), jnp.float32),
            "attn_ln_b": jnp.zeros((hidden,), jnp.float32),
            "wi": (std * jax.random.normal(lk[4], (hidden, intermediate), jnp.float32)
                   ).astype(jnp.bfloat16),
            "bi": jnp.zeros((intermediate,), jnp.float32),
            "wo2": (std * jax.random.normal(lk[5], (intermediate, hidden), jnp.float32)
                    ).astype(jnp.bfloat16),
            "bo2": jnp.zeros((hidden,), jnp.float32),
            "out_ln_g": jnp.ones((hidden,), jnp.float32),
            "out_ln_b": jnp.zeros((hidden,), jnp.float32),
        })
    return params


# ----------------------------------------------------------------------------
# Seq2SeqBertEncoder.forward
# ----------------------------------------------------------------------------
def seq2seq_bert_encoder_forward(params, input_ids, token_type_ids=None,
                                 attention_mask=None, token_recovery_matrix=None,
                                 num_heads=4):
    b, s = input_ids.shape
    hidden = params["word_emb"].shape[1]

    if token_type_ids is None:
        token_type_ids = jnp.zeros_like(input_ids)
    if attention_mask is None:
        attention_mask = jnp.ones((b, s), jnp.float32)

    # --- embeddings (lookups are glue; LayerNorm is a Pallas kernel) ---
    x = (jnp.take(params["word_emb"], input_ids, axis=0)
         + params["pos_emb"][None, :s, :]
         + jnp.take(params["type_emb"], token_type_ids, axis=0))
    x = pallas_layernorm(x.reshape(b * s, hidden),
                         params["emb_ln_g"], params["emb_ln_b"])       # bf16

    # extended additive attention mask, kept as [B, 1, S] (no per-head copies)
    bias = ((1.0 - attention_mask.astype(jnp.float32)) * -10000.0).reshape(b, 1, s)

    # --- transformer layers ---
    for layer in params["layers"]:
        # fused QKV projection: one [M, H] x [H, 3H] matmul; stays fused in HBM
        qkv = pallas_linear(x, layer["wqkv"], layer["bqkv"])           # bf16 [M, 3H]
        ctx = pallas_attention(qkv.reshape(b, s, 3 * hidden), bias,
                               num_heads=num_heads)                    # bf16 [B, S, H]

        # output projection fused with bias + residual + LayerNorm
        x = pallas_linear_residual_layernorm(
            ctx.reshape(b * s, hidden), layer["wo"], layer["bo"],
            x, layer["attn_ln_g"], layer["attn_ln_b"])

        inter = pallas_linear(x, layer["wi"], layer["bi"], gelu=True)  # bf16
        x = pallas_linear_residual_layernorm(
            inter, layer["wo2"], layer["bo2"],
            x, layer["out_ln_g"], layer["out_ln_b"])

    encoded_layers = x.reshape(b, s, hidden)

    if token_recovery_matrix is None:
        return encoded_layers.astype(jnp.float32)
    return pallas_average_pooling(encoded_layers, token_recovery_matrix)


# ----------------------------------------------------------------------------
if __name__ == "__main__":
    key = jax.random.PRNGKey(0)
    k_param, k_ids, k_type, k_rec = jax.random.split(key, 4)

    B, S, HIDDEN, HEADS, INTER, LAYERS = 2, 8, 128, 4, 256, 2
    VOCAB, MAX_POS, TYPE_VOCAB = 64, 16, 2
    T, NS = 6, 3   # num_tokens, num_subwords for the recovery matrix

    params = init_bert_params(k_param, VOCAB, HIDDEN, LAYERS, INTER, MAX_POS, TYPE_VOCAB)

    input_ids = jax.random.randint(k_ids, (B, S), 0, VOCAB, dtype=jnp.int32)
    token_type_ids = jax.random.randint(k_type, (B, S), 0, TYPE_VOCAB, dtype=jnp.int32)
    # second sequence has 2 padding positions
    attention_mask = (jnp.arange(S)[None, :] < jnp.array([[S], [S - 2]])).astype(jnp.float32)
    token_recovery_matrix = jax.random.randint(k_rec, (B, T, NS), 0, S, dtype=jnp.int32)

    out = seq2seq_bert_encoder_forward(
        params, input_ids, token_type_ids, attention_mask,
        token_recovery_matrix, num_heads=HEADS)
    out = jax.block_until_ready(out)
    assert out.shape == (B, T, HIDDEN), out.shape
    assert out.dtype == jnp.float32

    # also exercise the no-recovery-matrix path (returns raw encoded layers)
    enc = jax.block_until_ready(
        seq2seq_bert_encoder_forward(params, input_ids, token_type_ids,
                                     attention_mask, None, num_heads=HEADS))
    assert enc.shape == (B, S, HIDDEN), enc.shape

    print("KERNEL_OK")
</pallas_src>

<mosaic_0001>
module attributes {stable_mosaic.version = 11 : i64} {
  func.func @_layernorm_kernel(%arg0: i32, %arg1: memref<16x128xf32, #tpu.memory_space<vmem>>, %arg2: memref<1x128xf32, #tpu.memory_space<vmem>>, %arg3: memref<1x128xf32, #tpu.memory_space<vmem>>, %arg4: memref<16x128xbf16, #tpu.memory_space<vmem>>) attributes {dimension_semantics = [#tpu.dimension_semantics<parallel>], iteration_bounds = array<i64: 1>, scalar_prefetch = 0 : i64, scratch_operands = 0 : i64, tpu.core_type = #tpu.core_type<tc>, window_params = [{transform_indices = @transform_0, window_bounds = array<i64: 16, 128>}, {pipeline_mode = #tpu.pipeline_mode<synchronous>, transform_indices = @transform_1, window_bounds = array<i64: 1, 128>}, {pipeline_mode = #tpu.pipeline_mode<synchronous>, transform_indices = @transform_2, window_bounds = array<i64: 1, 128>}, {transform_indices = @transform_3, window_bounds = array<i64: 16, 128>}]} {
    %c0 = arith.constant 0 : index
    %c0_0 = arith.constant 0 : index
    %0 = vector.load %arg1[%c0, %c0_0] : memref<16x128xf32, #tpu.memory_space<vmem>>, vector<16x128xf32>
    %cst = arith.constant dense<0.000000e+00> : vector<16xf32>
    %1 = vector.multi_reduction <add>, %0, %cst [1] : vector<16x128xf32> to vector<16xf32>
    %2 = vector.shape_cast %1 : vector<16xf32> to vector<16x1xf32>
    %cst_1 = arith.constant 1.280000e+02 : f32
    %3 = vector.broadcast %cst_1 : f32 to vector<16x1xf32>
    %4 = arith.divf %2, %3 : vector<16x1xf32>
    %5 = vector.broadcast %4 : vector<16x1xf32> to vector<16x128xf32>
    %6 = arith.subf %0, %5 : vector<16x128xf32>
    %7 = arith.mulf %6, %6 : vector<16x128xf32>
    %cst_2 = arith.constant dense<0.000000e+00> : vector<16xf32>
    %8 = vector.multi_reduction <add>, %7, %cst_2 [1] : vector<16x128xf32> to vector<16xf32>
    %9 = vector.shape_cast %8 : vector<16xf32> to vector<16x1xf32>
    %cst_3 = arith.constant 1.280000e+02 : f32
    %10 = vector.broadcast %cst_3 : f32 to vector<16x1xf32>
    %11 = arith.divf %9, %10 : vector<16x1xf32>
    %cst_4 = arith.constant 9.99999996E-13 : f32
    %12 = vector.broadcast %cst_4 : f32 to vector<16x1xf32>
    %13 = arith.addf %11, %12 : vector<16x1xf32>
    %14 = math.rsqrt %13 : vector<16x1xf32>
    %15 = vector.broadcast %4 : vector<16x1xf32> to vector<16x128xf32>
    %16 = arith.subf %0, %15 : vector<16x128xf32>
    %17 = vector.broadcast %14 : vector<16x1xf32> to vector<16x128xf32>
    %18 = arith.mulf %16, %17 : vector<16x128xf32>
    %c0_5 = arith.constant 0 : index
    %c0_6 = arith.constant 0 : index
    %19 = vector.load %arg2[%c0_5, %c0_6] : memref<1x128xf32, #tpu.memory_space<vmem>>, vector<1x128xf32>
    %20 = vector.broadcast %19 : vector<1x128xf32> to vector<16x128xf32>
    %21 = arith.mulf %18, %20 : vector<16x128xf32>
    %c0_7 = arith.constant 0 : index
    %c0_8 = arith.constant 0 : index
    %22 = vector.load %arg3[%c0_7, %c0_8] : memref<1x128xf32, #tpu.memory_space<vmem>>, vector<1x128xf32>
    %23 = vector.broadcast %22 : vector<1x128xf32> to vector<16x128xf32>
    %24 = arith.addf %21, %23 : vector<16x128xf32>
    %25 = arith.truncf %24 : vector<16x128xf32> to vector<16x128xbf16>
    %c0_9 = arith.constant 0 : index
    %c0_10 = arith.constant 0 : index
    %26 = vector.load %arg4[%c0_9, %c0_10] : memref<16x128xbf16, #tpu.memory_space<vmem>>, vector<16x128xbf16>
    tpu.vector_store %arg4[%c0_9, %c0_10], %25 {strides = array<i32>} : memref<16x128xbf16, #tpu.memory_space<vmem>>, vector<16x128xbf16>,
    return
  }
  func.func @transform_0(%arg0: i32) -> (i32, i32) {
    %c0_i32 = arith.constant 0 : i32
    %c0_i32_0 = arith.constant 0 : i32
    return %arg0, %c0_i32 : i32, i32
  }
  func.func @transform_1(%arg0: i32) -> (i32, i32) {
    %c0_i32 = arith.constant 0 : i32
    %c0_i32_0 = arith.constant 0 : i32
    %c0_i32_1 = arith.constant 0 : i32
    return %c0_i32, %c0_i32_0 : i32, i32
  }
  func.func @transform_2(%arg0: i32) -> (i32, i32) {
    %c0_i32 = arith.constant 0 : i32
    %c0_i32_0 = arith.constant 0 : i32
    %c0_i32_1 = arith.constant 0 : i32
    return %c0_i32, %c0_i32_0 : i32, i32
  }
  func.func @transform_3(%arg0: i32) -> (i32, i32) {
    %c0_i32 = arith.constant 0 : i32
    %c0_i32_0 = arith.constant 0 : i32
    return %arg0, %c0_i32 : i32, i32
  }
}

</mosaic_0001>

<llo_original>
// kernel: tpu_custom_call.1
$region0: #{tpu_custom_call.1}
  #allocation0 [shape = 'u32[]', space=smem, size = 0x4, offset = 0x4, fixed_abs, tag = 'smem constant byte address 0x4 - core index']
  #allocation1 [shape = 'u32[144,128]{1,0:T(1,128)}', space=vmem, size = 0x12000, scoped, tag = 'internal scratch']
  %s0 = inlined_call_operand.hbm [shape: f32[16,128], index: 0, kind: input, shape index: {}]
  %s1 = inlined_call_operand.vmem [shape: f32[1,128], index: 1, kind: input, shape index: {}]
  %s2 = inlined_call_operand.vmem [shape: f32[1,128], index: 2, kind: input, shape index: {}]
  %s3 = inlined_call_operand.hbm [shape: bf16[16,128], index: 3, kind: output, shape index: {}]
  %s4 = sld [smem:[#allocation0]]
  $region26: #{tpu_custom_call.1} parent=0
    _
  %s6 = ssub.s32 1, %s4
  %s7 = scalar_select 0, %s6, %s4
  $region1: #{tpu_custom_call.1} parent=0
    #allocation2 [shape = 'u8[8192]{0}', space=vmem, size = 0x2000, scoped, tag = 'input window, operand 0, single buffered']
    #allocation3 [shape = 's32[1]{0}', space=sflag, size = 0x4, scoped, tag = 'scoped memory for tpu_custom_call.1']
    #allocation4 [shape = 's32[1]{0}', space=sflag, size = 0x4, scoped, tag = 'scoped memory for tpu_custom_call.1']
    #allocation5 [shape = 'u8[4096]{0}', space=vmem, size = 0x1000, scoped, tag = 'output window, operand 0, single buffered']
    %8 = vsyncpa [#allocation3], 0
    %9 = vsyncpa [#allocation4], 0
    // Predicated region
    $region2: #{tpu_custom_call.1} parent=1 // pred_check
      _
    $region3: #{tpu_custom_call.1} parent=1 // pred_check_branch
      %11 = sbr.rel (0) target = $region5
    $region4: #{tpu_custom_call.1} parent=1 // pred_region
      %s13 = ssub.s32 256, 256
      %14 = vsyncadd [#allocation3], %s13
      %s15 = sshll.u32 [#allocation2], 4
      %s16 = int_to_ptr.vmem [resolvable:$true] %s15
      %21 = dma.hbm_to_vmem [thread:$0]  %s0, 256, %s16, [#allocation3], 128, 128, 8
    $region5: #{tpu_custom_call.1} parent=1 // pred_fallthru
      _
    // Predicated region
    $region6: #{tpu_custom_call.1} parent=1 // pred_check
      _
    $region7: #{tpu_custom_call.1} parent=1 // pred_check_branch
      %23 = sbr.rel (0) target = $region9
    $region8: #{tpu_custom_call.1} parent=1 // pred_region
      _
    $region9: #{tpu_custom_call.1} parent=1 // pred_fallthru
      _
    // Predicated region
    $region10: #{tpu_custom_call.1} parent=1 // pred_check
      _
    $region11: #{tpu_custom_call.1} parent=1 // pred_check_branch
      %25 = sbr.rel (0) target = $region13
    $region12: #{tpu_custom_call.1} parent=1 // pred_region
      _
    $region13: #{tpu_custom_call.1} parent=1 // pred_fallthru
      _
    // Predicated region
    $region14: #{tpu_custom_call.1} parent=1 // pred_check
      _
    $region15: #{tpu_custom_call.1} parent=1 // pred_check_branch
      %27 = sbr.rel (0) target = $region17
    $region16: #{tpu_custom_call.1} parent=1 // pred_region
      %28 = dma.done [#allocation3], 256
    $region17: #{tpu_custom_call.1} parent=1 // pred_fallthru
      _
    %v29 = vld [vmem:[#allocation2] sm:$0xff]
    %v30 = vld [vmem:[#allocation2 + $0x8] sm:$0xff]
    %31 = vadd.xlane.f32.xlu0 %v29
    %v32 = vpop.xlane.xlu0 %31
    %33 = vadd.xlane.f32.xlu0 %v30
    %v34 = vpop.xlane.xlu0 %33
    %v35 = vrcp.pop 128.0
    %v36 = vmul.f32 %v32, %v35
    %v37 = vmul.f32 %v34, %v35
    %v38 = vsub.f32 %v29, %v36
    %v39 = vsub.f32 %v30, %v37
    %v40 = vmul.f32 %v38, %v38
    %v41 = vmul.f32 %v39, %v39
    %42 = vadd.xlane.f32.xlu0 %v40
    %v43 = vpop.xlane.xlu0 %42
    %44 = vadd.xlane.f32.xlu0 %v41
    %v45 = vpop.xlane.xlu0 %44
    %v46 = vmul.f32 %v43, %v35
    %v47 = vmul.f32 %v45, %v35
    %v48 = vadd.f32 %v46, 1e-12
    %v49 = vadd.f32 %v47, 1e-12
    %v50 = vrsqrt.pop %v48
    %v51 = vrsqrt.pop %v49
    %v52 = vmul.f32 %v38, %v50
    %v53 = vmul.f32 %v39, %v51
    %v54 = vld [vmem:[%s1] sm:$0x1]
    %v56 = vlaneseq
    %v57 = vshrl.u32 %v56, 7
    %v58 = vsub.s32 0, %v57
    %v59 = vrot.slane %v54, %v58
    %v61 = vmul.f32 %v52, %v59
    %v62 = vmul.f32 %v53, %v59
    %v63 = vld [vmem:[%s2] sm:$0x1]
    %v65 = vlaneseq
    %v66 = vshrl.u32 %v65, 7
    %v67 = vsub.s32 0, %v66
    %v68 = vrot.slane %v63, %v67
    %v70 = vadd.f32 %v61, %v68
    %v71 = vadd.f32 %v62, %v68
    %v72 = vpack.c.bf16 %v71, %v70
    %v74 = vunpack.c.l.b16 %v72
    %v75 = vunpack.c.h.b16 %v72
    %v76 = vpack.c.b16 %v74, %v74
    %v77 = vpack.c.b16 %v75, %v75
    %80 = vst [vmem:[#allocation5] sm:$0xf] %v76
    %81 = vst [vmem:[#allocation5 + $0x4] sm:$0xf] %v77
    // Predicated region
    $region18: #{tpu_custom_call.1} parent=1 // pred_check
      _
    $region19: #{tpu_custom_call.1} parent=1 // pred_check_branch
      %83 = sbr.rel (0) target = $region21
    $region20: #{tpu_custom_call.1} parent=1 // pred_region
      %s85 = ssub.s32 128, 128
      %86 = vsyncadd [#allocation4], %s85
      %s87 = sshll.u32 [#allocation5], 4
      %s88 = int_to_ptr.vmem [resolvable:$true] %s87
      %93 = dma.vmem_to_hbm [thread:$0]  %s88, 128, %s3, [#allocation4], 64, 64, 4
    $region21: #{tpu_custom_call.1} parent=1 // pred_fallthru
      _
    // Predicated region
    $region22: #{tpu_custom_call.1} parent=1 // pred_check
      _
    $region23: #{tpu_custom_call.1} parent=1 // pred_check_branch
      %95 = sbr.rel (0) target = $region25
    $region24: #{tpu_custom_call.1} parent=1 // pred_region
      %96 = dma.done [#allocation4], 128
    $region25: #{tpu_custom_call.1} parent=1 // pred_fallthru
      _
    %97 = vsyncpa [#allocation3], 1
    %98 = vsyncpa [#allocation4], 1

</llo_original>
